<compile_context>
chip_gen: v6e
topology: v6e:2x2x1
jax: 0.10.0
libtpu: 0.0.40
codegen_flags: <defaults>
</compile_context>

<pallas_src>
import jax
import jax.numpy as jnp
from jax import lax
from jax.experimental import pallas as pl
from jax.experimental.pallas import tpu as pltpu


# ----------------------------------------------------------------------------
# Tiled linear kernels (P1 pipelining + P3 accumulator + P9 megacore)
# ----------------------------------------------------------------------------
def _matmul_kernel(x_ref, w_ref, o_ref, acc_ref):
    @pl.when(pl.program_id(2) == 0)
    def _():
        acc_ref[...] = jnp.zeros_like(acc_ref)

    acc_ref[...] += jnp.dot(x_ref[...], w_ref[...],
                            preferred_element_type=jnp.float32)

    @pl.when(pl.program_id(2) == pl.num_programs(2) - 1)
    def _():
        o_ref[...] = acc_ref[...].astype(o_ref.dtype)


def _matmul_bias_kernel(x_ref, w_ref, b_ref, o_ref, acc_ref):
    @pl.when(pl.program_id(2) == 0)
    def _():
        acc_ref[...] = jnp.zeros_like(acc_ref)

    acc_ref[...] += jnp.dot(x_ref[...], w_ref[...],
                            preferred_element_type=jnp.float32)

    @pl.when(pl.program_id(2) == pl.num_programs(2) - 1)
    def _():
        o_ref[...] = (acc_ref[...]
                      + b_ref[...].astype(jnp.float32)).astype(o_ref.dtype)


def _round_up(x, m):
    return ((x + m - 1) // m) * m


def _plan_dim(dim, target, align):
    """Return (tile, padded_dim).  Small dims use a full-extent block (always
    legal); large dims use an aligned tile and are zero-padded to a multiple
    of it (zero rows/cols are inert for matmul; padding is sliced off)."""
    if dim <= target:
        return dim, dim
    tile = (target // align) * align
    return tile, _round_up(dim, tile)


def pallas_linear(x2d, w, b=None, *, tm_target=256, tn_target=512,
                  tk_target=1024):
    """x2d: (M, K), w: (K, Nout), optional b: (Nout,) -> (M, Nout)."""
    M, K = x2d.shape
    Kw, Nout = w.shape
    assert K == Kw

    tm, Mp = _plan_dim(M, tm_target, 8)        # second-to-last dims: mult of 8
    tn, Np = _plan_dim(Nout, tn_target, 128)   # last dims: mult of 128
    tk, Kp = _plan_dim(K, tk_target, 128)      # tk=K for K<=1024: weight tile
                                               # DMA'd once per (i, j)

    x_p = x2d if (Mp == M and Kp == K) else jnp.pad(x2d, ((0, Mp - M), (0, Kp - K)))
    w_p = w if (Kp == K and Np == Nout) else jnp.pad(w, ((0, Kp - K), (0, Np - Nout)))

    grid = (Mp // tm, Np // tn, Kp // tk)      # reduction (K) axis last

    in_specs = [
        pl.BlockSpec((tm, tk), lambda i, j, k: (i, k)),
        pl.BlockSpec((tk, tn), lambda i, j, k: (k, j)),
    ]
    operands = [x_p, w_p]
    kernel = _matmul_kernel
    if b is not None:
        b2 = b.reshape(1, Nout)
        if Np != Nout:
            b2 = jnp.pad(b2, ((0, 0), (0, Np - Nout)))
        in_specs.append(pl.BlockSpec((1, tn), lambda i, j, k: (0, j)))
        operands.append(b2)
        kernel = _matmul_bias_kernel

    out = pl.pallas_call(
        kernel,
        out_shape=jax.ShapeDtypeStruct((Mp, Np), x2d.dtype),
        grid=grid,
        in_specs=in_specs,
        out_specs=pl.BlockSpec((tm, tn), lambda i, j, k: (i, j)),
        scratch_shapes=[pltpu.VMEM((tm, tn), jnp.float32)],
        compiler_params=pltpu.CompilerParams(
            dimension_semantics=("parallel", "parallel", "arbitrary"),
            vmem_limit_bytes=32 * 1024 * 1024),
    )(*operands)

    if Mp != M or Np != Nout:
        out = out[:M, :Nout]
    return out


# ----------------------------------------------------------------------------
# Attention kernel: one (batch, head) pair per grid step.  q/k/v/out blocks
# are full (N, D) tiles -> lane-contiguous DMAs, no in-kernel head slicing,
# B*H parallel steps for megacore.  Softmax scale is pre-folded into q.
# ----------------------------------------------------------------------------
def _attn_kernel(q_ref, k_ref, v_ref, o_ref):
    q = q_ref[...]                                                # (N, D)
    k = k_ref[...]                                                # (N, D)

    # q @ k^T via dot_general contracting last dims -> no XLU transpose of k;
    # operands stay in their native dtype (bf16 hits the fast MXU path),
    # accumulation in f32.
    s = lax.dot_general(q, k, (((1,), (1,)), ((), ())),
                        preferred_element_type=jnp.float32)       # (N, N) f32

    m = jnp.max(s, axis=-1, keepdims=True)
    p = jnp.exp(s - m)                                            # f32 softmax
    denom = jnp.sum(p, axis=-1, keepdims=True)

    out = jnp.dot(p.astype(v_ref.dtype), v_ref[...],
                  preferred_element_type=jnp.float32)             # (N, D) f32

    # EUP reciprocal + one Newton step: ~f32 accuracy, no VALU divide over
    # the (N, D) tile.
    r = pl.reciprocal(denom, approx=True)
    r = r * (2.0 - denom * r)
    o_ref[...] = (out * r).astype(o_ref.dtype)


def pallas_attention(q, k, v):
    """q, k, v: (B, H, N, D) -> (B, H, N, D).  Scale already folded into q."""
    B, H, N, D = q.shape

    def make_spec():
        return pl.BlockSpec((None, None, N, D), lambda b, h: (b, h, 0, 0))

    return pl.pallas_call(
        _attn_kernel,
        out_shape=jax.ShapeDtypeStruct((B, H, N, D), q.dtype),
        grid=(B, H),
        in_specs=[make_spec(), make_spec(), make_spec()],
        out_specs=make_spec(),
        compiler_params=pltpu.CompilerParams(
            dimension_semantics=("parallel", "parallel"),
            vmem_limit_bytes=32 * 1024 * 1024),
    )(q, k, v)


# ----------------------------------------------------------------------------
# Full forward (matches Attention.forward with return_attention_scores=False)
# ----------------------------------------------------------------------------
def attention_forward(x, w_qkv, w_proj, b_proj, num_heads, compute_dtype=None):
    """x: (B, N, C); w_qkv: (C, 3C); w_proj: (C, C); b_proj: (C,).

    compute_dtype: if set (e.g. jnp.bfloat16), MXU operands of the linears
    and the attention matmuls are cast to it (f32 accumulation / softmax kept).
    """
    orig_dtype = x.dtype
    B, N, C = x.shape
    H = num_heads
    assert C % H == 0
    D = C // H

    # Fold the softmax scale into the q columns of the (constant) qkv weight:
    # removes the per-element q*scale in the kernel for free.
    w_qkv = jnp.concatenate([w_qkv[:, :C] * (D ** (-0.5)), w_qkv[:, C:]], axis=1)

    if compute_dtype is not None:
        x = x.astype(compute_dtype)
        w_qkv = w_qkv.astype(compute_dtype)
        w_proj = w_proj.astype(compute_dtype)

    # 1) qkv projection (qkv_bias=False -> no bias operand at all)
    qkv = pallas_linear(x.reshape(B * N, C), w_qkv)            # (B*N, 3C)

    # 2) layout for per-(batch, head) attention: same reshape/permute as the
    #    PyTorch module, done once in XLA (lane-aligned (N, D) tiles for the
    #    kernel).
    qkv = qkv.reshape(B, N, 3, H, D)
    qkv = jnp.transpose(qkv, (2, 0, 3, 1, 4))                  # (3, B, H, N, D)
    q, k, v = qkv[0], qkv[1], qkv[2]

    o = pallas_attention(q, k, v)                              # (B, H, N, D)

    # 3) merge heads (single XLA transpose) + output projection
    o = jnp.transpose(o, (0, 2, 1, 3)).reshape(B * N, C)       # (B*N, C)
    out = pallas_linear(o, w_proj, b_proj)                     # (B*N, C)
    return out.reshape(B, N, C).astype(orig_dtype)


# ----------------------------------------------------------------------------
# Pure-JAX reference (for correctness check)
# ----------------------------------------------------------------------------
def reference_forward(x, w_qkv, w_proj, b_proj, num_heads):
    B, N, C = x.shape
    H = num_heads
    D = C // H
    qkv = x @ w_qkv
    qkv = qkv.reshape(B, N, 3, H, D).transpose(2, 0, 3, 1, 4)
    q, k, v = qkv[0], qkv[1], qkv[2]
    attn = (q @ jnp.swapaxes(k, -2, -1)) * (D ** (-0.5))
    attn = jax.nn.softmax(attn, axis=-1)
    o = attn @ v                                               # (B, H, N, D)
    o = jnp.swapaxes(o, 1, 2).reshape(B, N, C)
    return o @ w_proj + b_proj


# ----------------------------------------------------------------------------
# Main
# ----------------------------------------------------------------------------
if __name__ == "__main__":
    B, N, C = 2, 8, 32
    num_heads = 4

    key = jax.random.PRNGKey(0)
    kx, kw1, kw2, kb2 = jax.random.split(key, 4)

    x = jax.random.normal(kx, (B, N, C), dtype=jnp.float32)

    # Parameters stored as (in, out) so the kernels compute x @ W.
    # nn.Linear(dim, 3*dim, bias=False) and nn.Linear(dim, dim).
    w_qkv = jax.random.normal(kw1, (C, 3 * C), dtype=jnp.float32) * (1.0 / jnp.sqrt(C))
    w_proj = jax.random.normal(kw2, (C, C), dtype=jnp.float32) * (1.0 / jnp.sqrt(C))
    b_proj = jax.random.normal(kb2, (C,), dtype=jnp.float32) * 0.02

    ref = reference_forward(x, w_qkv, w_proj, b_proj, num_heads)

    # f32 path: exact parity with the PyTorch module's default dtype.
    out = attention_forward(x, w_qkv, w_proj, b_proj, num_heads)
    out = jax.block_until_ready(out)
    assert out.shape == (B, N, C)
    assert jnp.allclose(out, ref, atol=1e-4, rtol=1e-4), "f32 mismatch vs reference"

    # bf16-MXU path (v6e/v7x fast path): f32 accumulation/softmax kept, so it
    # stays close to the f32 reference.
    out_bf16 = attention_forward(x, w_qkv, w_proj, b_proj, num_heads,
                                 compute_dtype=jnp.bfloat16)
    out_bf16 = jax.block_until_ready(out_bf16)
    assert out_bf16.shape == (B, N, C)
    assert jnp.allclose(out_bf16, ref, atol=1e-1, rtol=1e-1), "bf16 mismatch vs reference"

    print("KERNEL_OK")
</pallas_src>

<mosaic_0001>
module attributes {stable_mosaic.version = 11 : i64} {
  func.func @_matmul_kernel(%arg0: i32, %arg1: i32, %arg2: i32, %arg3: memref<16x32xf32, #tpu.memory_space<vmem>>, %arg4: memref<32x96xf32, #tpu.memory_space<vmem>>, %arg5: memref<16x96xf32, #tpu.memory_space<vmem>>, %arg6: memref<16x96xf32, #tpu.memory_space<vmem>>) attributes {dimension_semantics = [#tpu.dimension_semantics<parallel>, #tpu.dimension_semantics<parallel>, #tpu.dimension_semantics<arbitrary>], iteration_bounds = array<i64: 1, 1, 1>, scalar_prefetch = 0 : i64, scratch_operands = 1 : i64, tpu.core_type = #tpu.core_type<tc>, window_params = [{transform_indices = @transform_0, window_bounds = array<i64: 16, 32>}, {transform_indices = @transform_1, window_bounds = array<i64: 32, 96>}, {transform_indices = @transform_2, window_bounds = array<i64: 16, 96>}]} {
    %c0_i32 = arith.constant 0 : i32
    %0 = arith.cmpi eq, %arg2, %c0_i32 : i32
    %1 = arith.extui %0 : i1 to i32
    %c0_i32_0 = arith.constant 0 : i32
    %2 = arith.cmpi ne, %1, %c0_i32_0 : i32
    scf.if %2 {
      %cst_10 = arith.constant 0.000000e+00 : f32
      %12 = vector.broadcast %cst_10 : f32 to vector<16x96xf32>
      %c0_11 = arith.constant 0 : index
      %c0_12 = arith.constant 0 : index
      %13 = vector.load %arg6[%c0_11, %c0_12] : memref<16x96xf32, #tpu.memory_space<vmem>>, vector<16x96xf32>
      tpu.vector_store %arg6[%c0_11, %c0_12], %12 {strides = array<i32>} : memref<16x96xf32, #tpu.memory_space<vmem>>, vector<16x96xf32>,
    } else {
    }
    %c0 = arith.constant 0 : index
    %c0_1 = arith.constant 0 : index
    %3 = vector.load %arg6[%c0, %c0_1] : memref<16x96xf32, #tpu.memory_space<vmem>>, vector<16x96xf32>
    %c0_2 = arith.constant 0 : index
    %c0_3 = arith.constant 0 : index
    %4 = vector.load %arg3[%c0_2, %c0_3] : memref<16x32xf32, #tpu.memory_space<vmem>>, vector<16x32xf32>
    %c0_4 = arith.constant 0 : index
    %c0_5 = arith.constant 0 : index
    %5 = vector.load %arg4[%c0_4, %c0_5] : memref<32x96xf32, #tpu.memory_space<vmem>>, vector<32x96xf32>
    %cst = arith.constant dense<0.000000e+00> : vector<16x96xf32>
    %6 = tpu.matmul %4, %5, %cst {dimension_numbers = #tpu.dot_dimension_numbers<[1], [0], [0], [1], [0, 0, 1, 1], [], []>} : vector<16x32xf32>, vector<32x96xf32>, vector<16x96xf32> -> vector<16x96xf32>
    %7 = arith.addf %3, %6 : vector<16x96xf32>
    %c0_6 = arith.constant 0 : index
    %c0_7 = arith.constant 0 : index
    %8 = vector.load %arg6[%c0_6, %c0_7] : memref<16x96xf32, #tpu.memory_space<vmem>>, vector<16x96xf32>
    tpu.vector_store %arg6[%c0_6, %c0_7], %7 {strides = array<i32>} : memref<16x96xf32, #tpu.memory_space<vmem>>, vector<16x96xf32>,
    %c0_i32_8 = arith.constant 0 : i32
    %9 = arith.cmpi eq, %arg2, %c0_i32_8 : i32
    %10 = arith.extui %9 : i1 to i32
    %c0_i32_9 = arith.constant 0 : i32
    %11 = arith.cmpi ne, %10, %c0_i32_9 : i32
    scf.if %11 {
      %c0_10 = arith.constant 0 : index
      %c0_11 = arith.constant 0 : index
      %12 = vector.load %arg6[%c0_10, %c0_11] : memref<16x96xf32, #tpu.memory_space<vmem>>, vector<16x96xf32>
      %c0_12 = arith.constant 0 : index
      %c0_13 = arith.constant 0 : index
      %13 = vector.load %arg5[%c0_12, %c0_13] : memref<16x96xf32, #tpu.memory_space<vmem>>, vector<16x96xf32>
      tpu.vector_store %arg5[%c0_12, %c0_13], %12 {strides = array<i32>} : memref<16x96xf32, #tpu.memory_space<vmem>>, vector<16x96xf32>,
    } else {
    }
    return
  }
  func.func @transform_0(%arg0: i32, %arg1: i32, %arg2: i32) -> (i32, i32) {
    %c0_i32 = arith.constant 0 : i32
    return %arg0, %arg2 : i32, i32
  }
  func.func @transform_1(%arg0: i32, %arg1: i32, %arg2: i32) -> (i32, i32) {
    %c0_i32 = arith.constant 0 : i32
    return %arg2, %arg1 : i32, i32
  }
  func.func @transform_2(%arg0: i32, %arg1: i32, %arg2: i32) -> (i32, i32) {
    %c0_i32 = arith.constant 0 : i32
    return %arg0, %arg1 : i32, i32
  }
}

</mosaic_0001>

<llo_original>
// kernel: tpu_custom_call.1
$region0: #{tpu_custom_call.1}
  #allocation0 [shape = 'u32[]', space=smem, size = 0x4, offset = 0x4, fixed_abs, tag = 'smem constant byte address 0x4 - core index']
  #allocation1 [shape = 'u32[144,128]{1,0:T(1,128)}', space=vmem, size = 0x12000, scoped, tag = 'internal scratch']
  #allocation2 [shape = 'f32[16,96]{1,0:T(8,128)}', space=vmem, size = 0x2000, scoped, tag = 'scratch operand']
  %s0 = inlined_call_operand.hbm [shape: f32[16,32], index: 0, kind: input, shape index: {}]
  %s1 = inlined_call_operand.hbm [shape: f32[32,96], index: 1, kind: input, shape index: {}]
  %s2 = inlined_call_operand.hbm [shape: f32[16,96], index: 2, kind: output, shape index: {}]
  %s3 = sld [smem:[#allocation0]]
  $region34: #{tpu_custom_call.1} parent=0
    _
  %s5 = ssub.s32 1, %s3
  %s6 = scalar_select 0, %s5, %s3
  $region1: #{tpu_custom_call.1} parent=0
    #allocation3 [shape = 'u8[8192]{0}', space=vmem, size = 0x2000, scoped, tag = 'input window, operand 0, single buffered']
    #allocation4 [shape = 's32[1]{0}', space=sflag, size = 0x4, scoped, tag = 'scoped memory for tpu_custom_call.1']
    #allocation5 [shape = 's32[1]{0}', space=sflag, size = 0x4, scoped, tag = 'scoped memory for tpu_custom_call.1']
    #allocation6 [shape = 'u8[16384]{0}', space=vmem, size = 0x4000, scoped, tag = 'input window, operand 1, single buffered']
    #allocation7 [shape = 's32[1]{0}', space=sflag, size = 0x4, scoped, tag = 'scoped memory for tpu_custom_call.1']
    #allocation8 [shape = 'u8[8192]{0}', space=vmem, size = 0x2000, scoped, tag = 'output window, operand 0, single buffered']
    %7 = vsyncpa [#allocation4], 0
    %8 = vsyncpa [#allocation7], 0
    %9 = vsyncpa [#allocation5], 0
    // Predicated region
    $region2: #{tpu_custom_call.1} parent=1 // pred_check
      _
    $region3: #{tpu_custom_call.1} parent=1 // pred_check_branch
      %11 = sbr.rel (0) target = $region5
    $region4: #{tpu_custom_call.1} parent=1 // pred_region
      %s13 = ssub.s32 256, 256
      %14 = vsyncadd [#allocation4], %s13
      %s15 = sshll.u32 [#allocation3], 4
      %s16 = int_to_ptr.vmem [resolvable:$true] %s15
      %21 = dma.hbm_to_vmem [thread:$0]  %s0, 256, %s16, [#allocation4], 128, 128, 8
    $region5: #{tpu_custom_call.1} parent=1 // pred_fallthru
      _
    // Predicated region
    $region6: #{tpu_custom_call.1} parent=1 // pred_check
      _
    $region7: #{tpu_custom_call.1} parent=1 // pred_check_branch
      %23 = sbr.rel (0) target = $region9
    $region8: #{tpu_custom_call.1} parent=1 // pred_region
      %s25 = ssub.s32 512, 512
      %26 = vsyncadd [#allocation7], %s25
      %s27 = sshll.u32 [#allocation6], 4
      %s28 = int_to_ptr.vmem [resolvable:$true] %s27
      %33 = dma.hbm_to_vmem [thread:$0]  %s1, 512, %s28, [#allocation7], 128, 128, 8
    $region9: #{tpu_custom_call.1} parent=1 // pred_fallthru
      _
    // Predicated region
    $region10: #{tpu_custom_call.1} parent=1 // pred_check
      _
    $region11: #{tpu_custom_call.1} parent=1 // pred_check_branch
      %35 = sbr.rel (0) target = $region13
    $region12: #{tpu_custom_call.1} parent=1 // pred_region
      %36 = dma.done [#allocation4], 256
    $region13: #{tpu_custom_call.1} parent=1 // pred_fallthru
      _
    // Predicated region
    $region14: #{tpu_custom_call.1} parent=1 // pred_check
      _
    $region15: #{tpu_custom_call.1} parent=1 // pred_check_branch
      %38 = sbr.rel (0) target = $region17
    $region16: #{tpu_custom_call.1} parent=1 // pred_region
      %39 = dma.done [#allocation7], 512
    $region17: #{tpu_custom_call.1} parent=1 // pred_fallthru
      _
    %p40 = scmp.eq.s32.totalorder 0, 0
    // Predicated region
    $region18: #{tpu_custom_call.1} parent=1 // pred_check
      %p41 = pneg %p40
    $region19: #{tpu_custom_call.1} parent=1 // pred_check_branch
      %43 = sbr.rel (%p41) target = $region21
    $region20: #{tpu_custom_call.1} parent=1 // pred_region
      %vm44 = vcmask 785408
      %45 = vst.msk [vmem:[#allocation2] sm:$0xff] %vm44, 0.0
      %46 = vst.msk [vmem:[#allocation2 + $0x8] sm:$0xff] %vm44, 0.0
    $region21: #{tpu_custom_call.1} parent=1 // pred_fallthru
      _
    %v47 = vld [vmem:[#allocation2] sm:$0xff]
    %v48 = vld [vmem:[#allocation2 + $0x8] sm:$0xff]
    %v49 = vld [vmem:[#allocation3] sm:$0xff]
    %v50 = vld [vmem:[#allocation3 + $0x8] sm:$0xff]
    %v51 = vld [vmem:[#allocation6] sm:$0xff]
    %v52 = vld [vmem:[#allocation6 + $0x8] sm:$0xff]
    %v53 = vld [vmem:[#allocation6 + $0x10] sm:$0xff]
    %v54 = vld [vmem:[#allocation6 + $0x18] sm:$0xff]
    %vm55 = vcmask 261120
    %v57 = vsel %vm55, %v49, 0
    %v60 = vsel %vm55, %v50, 0
    %62 = vmatprep.subr.mxu0 0.0
    %63 = vmatpush1.msra.mxu0 0.0
    %64 = vmatprep.subr.mxu0 0.0
    %65 = vmatpush1.msra.mxu0 0.0
    %66 = vmatprep.subr.mxu0 0.0
    %67 = vmatpush1.msra.mxu0 0.0
    %68 = vmatprep.subr.mxu0 0.0
    %69 = vmatpush1.msra.mxu0 0.0
    %70 = vmatprep.subr.mxu0 0.0
    %71 = vmatpush1.msra.mxu0 0.0
    %72 = vmatprep.subr.mxu0 0.0
    %73 = vmatpush1.msra.mxu0 0.0
    %74 = vmatprep.subr.mxu0 0.0
    %75 = vmatpush1.msra.mxu0 0.0
    %76 = vmatprep.subr.mxu0 0.0
    %77 = vmatpush1.msra.mxu0 0.0
    %78 = vmatprep.subr.mxu0 0.0
    %79 = vmatpush1.msra.mxu0 0.0
    %80 = vmatprep.subr.mxu0 0.0
    %81 = vmatpush1.msra.mxu0 0.0
    %82 = vmatprep.subr.mxu0 0.0
    %83 = vmatpush1.msra.mxu0 0.0
    %84 = vmatprep.subr.mxu0 0.0
    %85 = vmatpush1.msra.mxu0 0.0
    %86 = vmatprep.subr.mxu0 0.0
    %87 = vmatpush1.msra.mxu0 %v54
    %88 = vmatprep.subr.mxu0 0.0
    %89 = vmatpush1.msra.mxu0 %v53
    %90 = vmatprep.subr.mxu0 0.0
    %91 = vmatpush1.msra.mxu0 %v52
    %92 = vmatprep.subr.mxu0 0.0
    %93 = vmatpush1.msra.mxu0 %v51
    %94 = vmatprep.subr.mxu0 0.0
    %95 = vmatpush2.msra.mxu0 0.0
    %96 = vmatprep.subr.mxu0 0.0
    %97 = vmatpush2.msra.mxu0 0.0
    %98 = vmatprep.subr.mxu0 0.0
    %99 = vmatpush2.msra.mxu0 0.0
    %100 = vmatprep.subr.mxu0 0.0
    %101 = vmatpush2.msra.mxu0 0.0
    %102 = vmatprep.subr.mxu0 0.0
    %103 = vmatpush2.msra.mxu0 0.0
    %104 = vmatprep.subr.mxu0 0.0
    %105 = vmatpush2.msra.mxu0 0.0
    %106 = vmatprep.subr.mxu0 0.0
    %107 = vmatpush2.msra.mxu0 0.0
    %108 = vmatprep.subr.mxu0 0.0
    %109 = vmatpush2.msra.mxu0 0.0
    %110 = vmatprep.subr.mxu0 0.0
    %111 = vmatpush2.msra.mxu0 0.0
    %112 = vmatprep.subr.mxu0 0.0
    %113 = vmatpush2.msra.mxu0 0.0
    %114 = vmatprep.subr.mxu0 0.0
    %115 = vmatpush2.msra.mxu0 0.0
    %116 = vmatprep.subr.mxu0 0.0
    %117 = vmatpush2.msra.mxu0 0.0
    %118 = vmatprep.subr.mxu0 0.0
    %119 = vmatpush2.msra.mxu0 0.0
    %120 = vmatprep.subr.mxu0 0.0
    %121 = vmatpush2.msra.mxu0 0.0
    %122 = vmatprep.subr.mxu0 0.0
    %123 = vmatpush2.msra.mxu0 0.0
    %124 = vmatprep.subr.mxu0 0.0
    %125 = vmatpush2.msra.mxu0 0.0
    %126 = vmatprep.mubr.f32.mxu0 0.0
    %127 = vmatmul.mubr.f32.gmra.mxu0 %v57
    %v128 = vpop.f32.mrf.mxu0
    %v129 = vadd.f32 0.0, %v128
    %v130 = vpop.f32.mrf.mxu0
    %131 = vmatprep.mubr.f32.mxu0 0.0
    %132 = vmatmul.mubr.f32.gmra.mxu0 %v60
    %v133 = vpop.f32.mrf.mxu0
    %v134 = vadd.f32 0.0, %v133
    %v135 = vpop.f32.mrf.mxu0
    %136 = vdwg.mxu0
    %v137 = vadd.f32 %v47, %v129
    %v138 = vadd.f32 %v48, %v134
    %vm139 = vcmask 785408
    %140 = vst.msk [vmem:[#allocation2] sm:$0xff] %vm139, %v137
    %141 = vst.msk [vmem:[#allocation2 + $0x8] sm:$0xff] %vm139, %v138
    // Predicated region
    $region22: #{tpu_custom_call.1} parent=1 // pred_check
      %p142 = pneg %p40
    $region23: #{tpu_custom_call.1} parent=1 // pred_check_branch
      %144 = sbr.rel (%p142) target = $region25
    $region24: #{tpu_custom_call.1} parent=1 // pred_region
      %v145 = vld [vmem:[#allocation2] sm:$0xff]
      %v146 = vld [vmem:[#allocation2 + $0x8] sm:$0xff]
      %147 = vst.msk [vmem:[#allocation8] sm:$0xff] %vm139, %v145
      %148 = vst.msk [vmem:[#allocation8 + $0x8] sm:$0xff] %vm139, %v146
    $region25: #{tpu_custom_call.1} parent=1 // pred_fallthru
      _
    // Predicated region
    $region26: #{tpu_custom_call.1} parent=1 // pred_check
      _
    $region27: #{tpu_custom_call.1} parent=1 // pred_check_branch
      %150 = sbr.rel (0) target = $region29
    $region28: #{tpu_custom_call.1} parent=1 // pred_region
      %s152 = ssub.s32 256, 256
      %153 = vsyncadd [#allocation5], %s152
      %s154 = sshll.u32 [#allocation8], 4
      %s155 = int_to_ptr.vmem [resolvable:$true] %s154
      %160 = dma.vmem_to_hbm [thread:$0]  %s155, 256, %s2, [#allocation5], 128, 128, 8
    $region29: #{tpu_custom_call.1} parent=1 // pred_fallthru
      _
    // Predicated region
    $region30: #{tpu_custom_call.1} parent=1 // pred_check
      _
    $region31: #{tpu_custom_call.1} parent=1 // pred_check_branch
      %162 = sbr.rel (0) target = $region33
    $region32: #{tpu_custom_call.1} parent=1 // pred_region
      %163 = dma.done [#allocation5], 256
    $region33: #{tpu_custom_call.1} parent=1 // pred_fallthru
      _
    %164 = vsyncpa [#allocation4], 1
    %165 = vsyncpa [#allocation7], 1
    %166 = vsyncpa [#allocation5], 1

</llo_original>
